<compile_context>
chip_gen: v5e
topology: v5e:2x2
jax: 0.10.0
libtpu: 0.0.40
codegen_flags: <defaults>
</compile_context>

<pallas_src>
import jax
import jax.numpy as jnp
from jax.experimental import pallas as pl
from jax.experimental.pallas import tpu as pltpu


# ----------------------------- Pallas kernel ------------------------------ #
def se_kernel(x_ref, w1t_ref, b1_ref, w2_ref, b2_ref, o_ref):
    # Block is (1, C, HW); squeeze the batch dim.
    x = x_ref[0]                                        # (C, HW)

    # ---- squeeze: global average pool over HW (lane reduction) ----
    pooled = jnp.mean(x, axis=-1, keepdims=True)        # (C, 1)

    # ---- excitation MLP on VPU/XLU (no degenerate MXU matmuls) ----
    # layer 1: h[i] = sum_c W1[i, c] * pooled[c]; w1t = W1^T has shape (C, I),
    # pooled (C, 1) broadcasts along lanes, sublane-reduce -> (1, I).
    h = jnp.sum(w1t_ref[...] * pooled, axis=0, keepdims=True) + b1_ref[...]   # (1, I)
    h = jnp.maximum(h, 0.0)
    # layer 2: z[c] = sum_i W2[c, i] * h[i]; w2 has shape (C, I), h (1, I)
    # broadcasts along sublanes, lane-reduce -> (C, 1).
    z = jnp.sum(w2_ref[...] * h, axis=1, keepdims=True) + b2_ref[...]         # (C, 1)
    wei = jax.nn.sigmoid(z)                             # (C, 1)

    # ---- scale: broadcast per-channel weight over the HW lanes ----
    o_ref[0] = x * wei
    # TODO(synk): the torch module's `print('scale:', scale.shape)` debug
    # print is intentionally omitted (pure side effect).


# ------------------------------ JAX wrapper -------------------------------- #
def seblock_pallas(x_nchw, params):
    B, C, H, W = x_nchw.shape
    HW = H * W
    w1, b1, w2, b2 = params          # torch Linear layout: w1 (I, C), w2 (C, I)
    I = w1.shape[0]

    # NCHW-native: pure reshape (view), no transpose -> no extra HBM traffic.
    x = x_nchw.reshape(B, C, HW)

    # Kernel-friendly orientations (tiny host-side transposes on weights only).
    w1t = jnp.transpose(w1)          # (C, I)
    b1r = b1[None, :]                # (1, I)
    b2c = b2[:, None]                # (C, 1)

    const = lambda shape: pl.BlockSpec(shape, lambda b: tuple(0 for _ in shape))

    out = pl.pallas_call(
        se_kernel,
        out_shape=jax.ShapeDtypeStruct((B, C, HW), jnp.float32),
        grid_spec=pltpu.PrefetchScalarGridSpec(
            num_scalar_prefetch=0,
            grid=(B,),
            in_specs=[
                pl.BlockSpec((1, C, HW), lambda b: (b, 0, 0)),  # x: lane dim = HW
                const((C, I)),   # W1^T  (VMEM-resident across grid steps)
                const((1, I)),   # b1
                const((C, I)),   # W2
                const((C, 1)),   # b2
            ],
            out_specs=pl.BlockSpec((1, C, HW), lambda b: (b, 0, 0)),
        ),
        compiler_params=pltpu.CompilerParams(dimension_semantics=("parallel",)),
    )(x, w1t, b1r, w2, b2c)

    return out.reshape(B, C, H, W)


# ------------------------- parameter construction ------------------------- #
def make_params(key, channels=32, r=0.5):
    inter = int(channels * r)
    k1, k2, k3, k4 = jax.random.split(key, 4)
    w1 = 0.2 * jax.random.normal(k1, (inter, channels), jnp.float32)   # (I, C)
    b1 = 0.05 * jax.random.normal(k2, (inter,), jnp.float32)           # (I,)
    w2 = 0.2 * jax.random.normal(k3, (channels, inter), jnp.float32)   # (C, I)
    b2 = 0.05 * jax.random.normal(k4, (channels,), jnp.float32)        # (C,)
    return (w1, b1, w2, b2)


# ----------------------------- pure-JAX reference -------------------------- #
def seblock_reference(x_nchw, params):
    w1, b1, w2, b2 = params
    pooled = jnp.mean(x_nchw, axis=(2, 3))                 # (B, C)
    h = jnp.maximum(pooled @ w1.T + b1, 0.0)               # (B, I)
    wei = jax.nn.sigmoid(h @ w2.T + b2)                    # (B, C)
    return x_nchw * wei[:, :, None, None]                  # (B, C, H, W)


# ---------------------------------- main ----------------------------------- #
if __name__ == "__main__":
    key = jax.random.PRNGKey(0)
    k_x, k_p = jax.random.split(key)

    B, C, H, W = 2, 32, 16, 16          # SEblock(channel=32, r=0.5) -> inter=16
    x = jax.random.normal(k_x, (B, C, H, W), jnp.float32)
    params = make_params(k_p, channels=C, r=0.5)

    out = jax.block_until_ready(seblock_pallas(x, params))

    ref = seblock_reference(x, params)
    assert out.shape == (B, C, H, W)
    assert jnp.allclose(out, ref, atol=1e-4, rtol=1e-4)

    print("KERNEL_OK")
</pallas_src>

<mosaic_0001>
module attributes {stable_mosaic.version = 11 : i64} {
  func.func @se_kernel(%arg0: i32, %arg1: memref<1x32x256xf32, #tpu.memory_space<vmem>>, %arg2: memref<32x16xf32, #tpu.memory_space<vmem>>, %arg3: memref<1x16xf32, #tpu.memory_space<vmem>>, %arg4: memref<32x16xf32, #tpu.memory_space<vmem>>, %arg5: memref<32x1xf32, #tpu.memory_space<vmem>>, %arg6: memref<1x32x256xf32, #tpu.memory_space<vmem>>) attributes {dimension_semantics = [#tpu.dimension_semantics<parallel>], iteration_bounds = array<i64: 2>, scalar_prefetch = 0 : i64, scratch_operands = 0 : i64, tpu.core_type = #tpu.core_type<tc>, window_params = [{transform_indices = @transform_0, window_bounds = array<i64: 1, 32, 256>}, {pipeline_mode = #tpu.pipeline_mode<synchronous>, transform_indices = @transform_1, window_bounds = array<i64: 32, 16>}, {pipeline_mode = #tpu.pipeline_mode<synchronous>, transform_indices = @transform_2, window_bounds = array<i64: 1, 16>}, {pipeline_mode = #tpu.pipeline_mode<synchronous>, transform_indices = @transform_3, window_bounds = array<i64: 32, 16>}, {pipeline_mode = #tpu.pipeline_mode<synchronous>, transform_indices = @transform_4, window_bounds = array<i64: 32, 1>}, {transform_indices = @transform_5, window_bounds = array<i64: 1, 32, 256>}]} {
    %c0 = arith.constant 0 : index
    %c0_0 = arith.constant 0 : index
    %c0_1 = arith.constant 0 : index
    %0 = vector.load %arg1[%c0, %c0_0, %c0_1] : memref<1x32x256xf32, #tpu.memory_space<vmem>>, vector<1x32x256xf32>
    %1 = vector.shape_cast %0 : vector<1x32x256xf32> to vector<32x256xf32>
    %cst = arith.constant dense<0.000000e+00> : vector<32xf32>
    %2 = vector.multi_reduction <add>, %1, %cst [1] : vector<32x256xf32> to vector<32xf32>
    %3 = vector.shape_cast %2 : vector<32xf32> to vector<32x1xf32>
    %cst_2 = arith.constant 2.560000e+02 : f32
    %4 = vector.broadcast %cst_2 : f32 to vector<32x1xf32>
    %5 = arith.divf %3, %4 : vector<32x1xf32>
    %c0_3 = arith.constant 0 : index
    %c0_4 = arith.constant 0 : index
    %6 = vector.load %arg2[%c0_3, %c0_4] : memref<32x16xf32, #tpu.memory_space<vmem>>, vector<32x16xf32>
    %7 = vector.broadcast %5 : vector<32x1xf32> to vector<32x16xf32>
    %8 = arith.mulf %6, %7 : vector<32x16xf32>
    %cst_5 = arith.constant dense<0.000000e+00> : vector<16xf32>
    %9 = vector.multi_reduction <add>, %8, %cst_5 [0] : vector<32x16xf32> to vector<16xf32>
    %10 = vector.shape_cast %9 : vector<16xf32> to vector<1x16xf32>
    %c0_6 = arith.constant 0 : index
    %c0_7 = arith.constant 0 : index
    %11 = vector.load %arg3[%c0_6, %c0_7] : memref<1x16xf32, #tpu.memory_space<vmem>>, vector<1x16xf32>
    %12 = arith.addf %10, %11 : vector<1x16xf32>
    %cst_8 = arith.constant 0.000000e+00 : f32
    %13 = vector.broadcast %cst_8 : f32 to vector<1x16xf32>
    %14 = arith.maximumf %12, %13 : vector<1x16xf32>
    %c0_9 = arith.constant 0 : index
    %c0_10 = arith.constant 0 : index
    %15 = vector.load %arg4[%c0_9, %c0_10] : memref<32x16xf32, #tpu.memory_space<vmem>>, vector<32x16xf32>
    %16 = vector.broadcast %14 : vector<1x16xf32> to vector<32x16xf32>
    %17 = arith.mulf %15, %16 : vector<32x16xf32>
    %cst_11 = arith.constant dense<0.000000e+00> : vector<32xf32>
    %18 = vector.multi_reduction <add>, %17, %cst_11 [1] : vector<32x16xf32> to vector<32xf32>
    %19 = vector.shape_cast %18 : vector<32xf32> to vector<32x1xf32>
    %c0_12 = arith.constant 0 : index
    %c0_13 = arith.constant 0 : index
    %20 = vector.load %arg5[%c0_12, %c0_13] : memref<32x1xf32, #tpu.memory_space<vmem>>, vector<32x1xf32>
    %21 = arith.addf %19, %20 : vector<32x1xf32>
    %22 = arith.negf %21 : vector<32x1xf32>
    %23 = math.exp %22 : vector<32x1xf32>
    %cst_14 = arith.constant 1.000000e+00 : f32
    %24 = vector.broadcast %cst_14 : f32 to vector<32x1xf32>
    %25 = arith.addf %24, %23 : vector<32x1xf32>
    %26 = arith.divf %24, %25 : vector<32x1xf32>
    %27 = vector.broadcast %26 : vector<32x1xf32> to vector<32x256xf32>
    %28 = arith.mulf %1, %27 : vector<32x256xf32>
    %c0_15 = arith.constant 0 : index
    %c0_16 = arith.constant 0 : index
    %c0_17 = arith.constant 0 : index
    %29 = vector.load %arg6[%c0_15, %c0_16, %c0_17] : memref<1x32x256xf32, #tpu.memory_space<vmem>>, vector<1x32x256xf32>
    %30 = vector.shape_cast %29 : vector<1x32x256xf32> to vector<32x256xf32>
    %31 = vector.shape_cast %28 : vector<32x256xf32> to vector<1x32x256xf32>
    tpu.vector_store %arg6[%c0_15, %c0_16, %c0_17], %31 {strides = array<i32>} : memref<1x32x256xf32, #tpu.memory_space<vmem>>, vector<1x32x256xf32>,
    return
  }
  func.func @transform_0(%arg0: i32) -> (i32, i32, i32) {
    %c0_i32 = arith.constant 0 : i32
    %c0_i32_0 = arith.constant 0 : i32
    %c0_i32_1 = arith.constant 0 : i32
    return %arg0, %c0_i32, %c0_i32_0 : i32, i32, i32
  }
  func.func @transform_1(%arg0: i32) -> (i32, i32) {
    %c0_i32 = arith.constant 0 : i32
    %c0_i32_0 = arith.constant 0 : i32
    %c0_i32_1 = arith.constant 0 : i32
    return %c0_i32, %c0_i32_0 : i32, i32
  }
  func.func @transform_2(%arg0: i32) -> (i32, i32) {
    %c0_i32 = arith.constant 0 : i32
    %c0_i32_0 = arith.constant 0 : i32
    %c0_i32_1 = arith.constant 0 : i32
    return %c0_i32, %c0_i32_0 : i32, i32
  }
  func.func @transform_3(%arg0: i32) -> (i32, i32) {
    %c0_i32 = arith.constant 0 : i32
    %c0_i32_0 = arith.constant 0 : i32
    %c0_i32_1 = arith.constant 0 : i32
    return %c0_i32, %c0_i32_0 : i32, i32
  }
  func.func @transform_4(%arg0: i32) -> (i32, i32) {
    %c0_i32 = arith.constant 0 : i32
    %c0_i32_0 = arith.constant 0 : i32
    %c0_i32_1 = arith.constant 0 : i32
    return %c0_i32, %c0_i32_0 : i32, i32
  }
  func.func @transform_5(%arg0: i32) -> (i32, i32, i32) {
    %c0_i32 = arith.constant 0 : i32
    %c0_i32_0 = arith.constant 0 : i32
    %c0_i32_1 = arith.constant 0 : i32
    return %arg0, %c0_i32, %c0_i32_0 : i32, i32, i32
  }
}

</mosaic_0001>

<llo_original>
// kernel: tpu_custom_call.1
$region0: #{tpu_custom_call.1}
  #allocation0 [shape = 'u32[]', space=smem, size = 0x4, offset = 0x4, fixed_abs, tag = 'smem constant byte address 0x4 - core index']
  #allocation1 [shape = 'u32[72,128]{1,0:T(1,128)}', space=vmem, size = 0x9000, scoped, tag = 'internal scratch']
  %s0 = inlined_call_operand.hbm [shape: f32[2,32,256], index: 0, kind: input, shape index: {}]
  %s1 = inlined_call_operand.vmem [shape: f32[32,16], index: 1, kind: input, shape index: {}]
  %s2 = inlined_call_operand.vmem [shape: f32[1,16], index: 2, kind: input, shape index: {}]
  %s3 = inlined_call_operand.vmem [shape: f32[32,16], index: 3, kind: input, shape index: {}]
  %s4 = inlined_call_operand.vmem [shape: f32[32,1], index: 4, kind: input, shape index: {}]
  %s5 = inlined_call_operand.hbm [shape: f32[2,32,256], index: 5, kind: output, shape index: {}]
  %s6 = sld [smem:[#allocation0]]
  $region57: #{tpu_custom_call.1} parent=0
    _
  %s8 = ssub.s32 1, %s6
  %s9 = scalar_select 0, %s8, %s6
  $region1: #{tpu_custom_call.1} parent=0
    #allocation2 [shape = 'u8[65536]{0}', space=vmem, size = 0x10000, scoped, tag = 'input window, operand 0']
    #allocation3 [shape = 's32[2]{0}', space=sflag, size = 0x8, scoped, tag = 'scoped memory for tpu_custom_call.1']
    #allocation4 [shape = 's32[2]{0}', space=sflag, size = 0x8, scoped, tag = 'scoped memory for tpu_custom_call.1']
    #allocation5 [shape = 'u8[65536]{0}', space=vmem, size = 0x10000, scoped, tag = 'output window, operand 0']
    %10 = vsyncpa [#allocation3], 0
    %s11 = scalar_lea.sflag [#allocation3], 1
    %12 = vsyncpa %s11, 0
    %13 = vsyncpa [#allocation4], 0
    %s14 = scalar_lea.sflag [#allocation4], 1
    %15 = vsyncpa %s14, 0
    loop: start=0, step=1, limit=4
    $region2: #{tpu_custom_call.1} parent=1 // loop_pre_header
      _
    $region3: #{tpu_custom_call.1} parent=1 // loop_header
      %s17 = sphi 0, %s21
      %p18 = scmp.ge.s32.totalorder %s17, 4
      %s27 = sphi 0, %s29
      %s30 = sphi 0, %s27
      %s31 = sphi 0, %s30
      %s47 = sphi 0, %s31
      %s51 = sphi 0, %s51
      %s53 = sphi 0, %s51
      %s54 = sphi 0, %s53
      %s68 = sphi 0, %s54
      %s72 = sphi 0, %s72
      %s74 = sphi 0, %s72
      %s75 = sphi 0, %s74
      %s89 = sphi 0, %s75
      %s93 = sphi 0, %s93
      %s95 = sphi 0, %s93
      %s96 = sphi 0, %s95
      %s110 = sphi 0, %s96
      %s114 = sphi 0, %s114
      %s116 = sphi 0, %s114
      %s117 = sphi 0, %s116
      %s131 = sphi 0, %s117
      %s137 = sphi 0, %s139
      %s140 = sphi 0, %s137
      %s141 = sphi 0, %s140
      %s157 = sphi 0, %s141
    $region4: #{tpu_custom_call.1} parent=1 // loop_header_branch
      %20 = sbr.rel (%p18) target = $region8
    $region5: #{tpu_custom_call.1} parent=1 // loop_body
      %s22 = ssub.s32 %s17, 1
      %s23 = ssub.s32 %s17, 2
      %s24 = sadd.s32 %s17, 1
      %s25 = ssub.s32 %s17, %s24
      %p26 = scmp.eq.s32.totalorder %s25, 0
      %s28 = sadd.s32 %s27, 1
      %s29 = scalar_select %p26, %s27, %s28
      %p32 = pneg %p26
      %p33 = scmp.eq.s32.totalorder %s17, 1
      %p34 = por %p32, %p33
      %p35 = scmp.ne.s32.totalorder %s27, %s30
      %p36 = scmp.eq.s32.totalorder %s17, 0
      %p37 = por %p35, %p36
      %p38 = scmp.ne.s32.totalorder %s27, %s30
      %p39 = scmp.eq.s32.totalorder %s22, 1
      %p40 = por %p38, %p39
      %p41 = scmp.ne.s32.totalorder %s30, %s31
      %p42 = scmp.eq.s32.totalorder %s22, 0
      %p43 = por %p41, %p42
      %p44 = scmp.ne.s32.totalorder %s30, %s31
      %p45 = scmp.eq.s32.totalorder %s23, 1
      %p46 = por %p44, %p45
      %p48 = scmp.ne.s32.totalorder %s31, %s47
      %p49 = scmp.eq.s32.totalorder %s23, 0
      %p50 = por %p48, %p49
      %s52 = sadd.s32 %s51, 1
      %p55 = scmp.eq.s32.totalorder %s17, 1
      %p56 = scmp.ne.s32.totalorder %s51, %s53
      %p57 = scmp.eq.s32.totalorder %s17, 0
      %p58 = por %p56, %p57
      %p59 = scmp.ne.s32.totalorder %s51, %s53
      %p60 = scmp.eq.s32.totalorder %s22, 1
      %p61 = por %p59, %p60
      %p62 = scmp.ne.s32.totalorder %s53, %s54
      %p63 = scmp.eq.s32.totalorder %s22, 0
      %p64 = por %p62, %p63
      %p65 = scmp.ne.s32.totalorder %s53, %s54
      %p66 = scmp.eq.s32.totalorder %s23, 1
      %p67 = por %p65, %p66
      %p69 = scmp.ne.s32.totalorder %s54, %s68
      %p70 = scmp.eq.s32.totalorder %s23, 0
      %p71 = por %p69, %p70
      %s73 = sadd.s32 %s72, 1
      %p76 = scmp.eq.s32.totalorder %s17, 1
      %p77 = scmp.ne.s32.totalorder %s72, %s74
      %p78 = scmp.eq.s32.totalorder %s17, 0
      %p79 = por %p77, %p78
      %p80 = scmp.ne.s32.totalorder %s72, %s74
      %p81 = scmp.eq.s32.totalorder %s22, 1
      %p82 = por %p80, %p81
      %p83 = scmp.ne.s32.totalorder %s74, %s75
      %p84 = scmp.eq.s32.totalorder %s22, 0
      %p85 = por %p83, %p84
      %p86 = scmp.ne.s32.totalorder %s74, %s75
      %p87 = scmp.eq.s32.totalorder %s23, 1
      %p88 = por %p86, %p87
      %p90 = scmp.ne.s32.totalorder %s75, %s89
      %p91 = scmp.eq.s32.totalorder %s23, 0
      %p92 = por %p90, %p91
      %s94 = sadd.s32 %s93, 1
      %p97 = scmp.eq.s32.totalorder %s17, 1
      %p98 = scmp.ne.s32.totalorder %s93, %s95
      %p99 = scmp.eq.s32.totalorder %s17, 0
      %p100 = por %p98, %p99
      %p101 = scmp.ne.s32.totalorder %s93, %s95
      %p102 = scmp.eq.s32.totalorder %s22, 1
      %p103 = por %p101, %p102
      %p104 = scmp.ne.s32.totalorder %s95, %s96
      %p105 = scmp.eq.s32.totalorder %s22, 0
      %p106 = por %p104, %p105
      %p107 = scmp.ne.s32.totalorder %s95, %s96
      %p108 = scmp.eq.s32.totalorder %s23, 1
      %p109 = por %p107, %p108
      %p111 = scmp.ne.s32.totalorder %s96, %s110
      %p112 = scmp.eq.s32.totalorder %s23, 0
      %p113 = por %p111, %p112
      %s115 = sadd.s32 %s114, 1
      %p118 = scmp.eq.s32.totalorder %s17, 1
      %p119 = scmp.ne.s32.totalorder %s114, %s116
      %p120 = scmp.eq.s32.totalorder %s17, 0
      %p121 = por %p119, %p120
      %p122 = scmp.ne.s32.totalorder %s114, %s116
      %p123 = scmp.eq.s32.totalorder %s22, 1
      %p124 = por %p122, %p123
      %p125 = scmp.ne.s32.totalorder %s116, %s117
      %p126 = scmp.eq.s32.totalorder %s22, 0
      %p127 = por %p125, %p126
      %p128 = scmp.ne.s32.totalorder %s116, %s117
      %p129 = scmp.eq.s32.totalorder %s23, 1
      %p130 = por %p128, %p129
      %p132 = scmp.ne.s32.totalorder %s117, %s131
      %p133 = scmp.eq.s32.totalorder %s23, 0
      %p134 = por %p132, %p133
      %s135 = ssub.s32 %s17, %s24
      %p136 = scmp.eq.s32.totalorder %s135, 0
      %s138 = sadd.s32 %s137, 1
      %s139 = scalar_select %p136, %s137, %s138
      %p142 = pneg %p136
      %p143 = scmp.eq.s32.totalorder %s17, 1
      %p144 = por %p142, %p143
      %p145 = scmp.ne.s32.totalorder %s137, %s140
      %p146 = scmp.eq.s32.totalorder %s17, 0
      %p147 = por %p145, %p146
      %p148 = scmp.ne.s32.totalorder %s137, %s140
      %p149 = scmp.eq.s32.totalorder %s22, 1
      %p150 = por %p148, %p149
      %p151 = scmp.ne.s32.totalorder %s140, %s141
      %p152 = scmp.eq.s32.totalorder %s22, 0
      %p153 = por %p151, %p152
      %p154 = scmp.ne.s32.totalorder %s140, %s141
      %p155 = scmp.eq.s32.totalorder %s23, 1
      %p156 = por %p154, %p155
      %p158 = scmp.ne.s32.totalorder %s141, %s157
      %p159 = scmp.eq.s32.totalorder %s23, 0
      %p160 = por %p158, %p159
      %p161 = scmp.le.s32.totalorder 1, %s17
      %p162 = scmp.lt.s32.totalorder %s17, 3
      %p163 = pnand %p161, %p162
      %p164 = pneg %p163
      // Predicated region
      $region9: #{tpu_custom_call.1} parent=5 // pred_check
        _
      $region10: #{tpu_custom_call.1} parent=5 // pred_check_branch
        %166 = sbr.rel (%p163) target = $region12
      $region11: #{tpu_custom_call.1} parent=5 // pred_region
        %s167 = ssub.s32 %s17, 1
        // Predicated region
        $region13: #{tpu_custom_call.1} parent=11 // pred_check
          %p168 = pneg %p64
        $region14: #{tpu_custom_call.1} parent=11 // pred_check_branch
          %170 = sbr.rel (%p168) target = $region16
        $region15: #{tpu_custom_call.1} parent=11 // pred_region
          _
        $region16: #{tpu_custom_call.1} parent=11 // pred_fallthru
          _
        // Predicated region
        $region17: #{tpu_custom_call.1} parent=11 // pred_check
          %p171 = pneg %p85
        $region18: #{tpu_custom_call.1} parent=11 // pred_check_branch
          %173 = sbr.rel (%p171) target = $region20
        $region19: #{tpu_custom_call.1} parent=11 // pred_region
          _
        $region20: #{tpu_custom_call.1} parent=11 // pred_fallthru
          _
        // Predicated region
        $region21: #{tpu_custom_call.1} parent=11 // pred_check
          %p174 = pneg %p106
        $region22: #{tpu_custom_call.1} parent=11 // pred_check_branch
          %176 = sbr.rel (%p174) target = $region24
        $region23: #{tpu_custom_call.1} parent=11 // pred_region
          _
        $region24: #{tpu_custom_call.1} parent=11 // pred_fallthru
          _
        // Predicated region
        $region25: #{tpu_custom_call.1} parent=11 // pred_check
          %p177 = pneg %p127
        $region26: #{tpu_custom_call.1} parent=11 // pred_check_branch
          %179 = sbr.rel (%p177) target = $region28
        $region27: #{tpu_custom_call.1} parent=11 // pred_region
          _
        $region28: #{tpu_custom_call.1} parent=11 // pred_fallthru
          _
      $region12: #{tpu_custom_call.1} parent=5 // pred_fallthru
        _
      %p180 = scmp.lt.s32.totalorder %s17, 2
      // Predicated region
      $region29: #{tpu_custom_call.1} parent=5 // pred_check
        %p181 = pneg %p180
      $region30: #{tpu_custom_call.1} parent=5 // pred_check_branch
        %183 = sbr.rel (%p181) target = $region32
      $region31: #{tpu_custom_call.1} parent=5 // pred_region
        // Predicated region
        $region33: #{tpu_custom_call.1} parent=31 // pred_check
          %p184 = pneg %p37
        $region34: #{tpu_custom_call.1} parent=31 // pred_check_branch
          %186 = sbr.rel (%p184) target = $region36
        $region35: #{tpu_custom_call.1} parent=31 // pred_region
          %s187 = sand.u32 %s27, 1
          %s188 = scalar_lea.sflag [#allocation3], %s187
          %s189 = sand.u32 %s27, 1
          %s190 = smul.addr %s189, 64
          %s191 = scalar_lea.vmem [#allocation2], %s190
          %193 = vsyncadd %s188, 0
          %s194 = smul.addr %s17, 8
          %s195 = smul.addr %s194, 8
          %s196 = scalar_lea.hbm %s0, %s195
          %s197 = sshll.u32 %s196, 4
          %s198 = int_to_ptr.hbm [resolvable:$true] %s197
          %s199 = sshll.u32 %s191, 4
          %s200 = int_to_ptr.vmem [resolvable:$true] %s199
          %205 = dma.hbm_to_vmem [thread:$0]  %s198, 1024, %s200, %s188, 256, 256, 16
        $region36: #{tpu_custom_call.1} parent=31 // pred_fallthru
          _
      $region32: #{tpu_custom_call.1} parent=5 // pred_fallthru
        _
      %p206 = scmp.le.s32.totalorder 1, %s17
      %p207 = scmp.lt.s32.totalorder %s17, 3
      %p208 = pnand %p206, %p207
      %p209 = pneg %p208
      // Predicated region
      $region37: #{tpu_custom_call.1} parent=5 // pred_check
        _
      $region38: #{tpu_custom_call.1} parent=5 // pred_check_branch
        %211 = sbr.rel (%p208) target = $region40
      $region39: #{tpu_custom_call.1} parent=5 // pred_region
        %s212 = ssub.s32 %s17, 1
        %s213 = sand.u32 %s30, 1
        %s214 = scalar_lea.sflag [#allocation3], %s213
        %s215 = sand.u32 %s30, 1
        %s216 = smul.addr %s215, 64
        %s217 = scalar_lea.vmem [#allocation2], %s216
        // Predicated region
        $region41: #{tpu_custom_call.1} parent=39 // pred_check
          %p218 = pneg %p43
        $region42: #{tpu_custom_call.1} parent=39 // pred_check_branch
          %220 = sbr.rel (%p218) target = $region44
        $region43: #{tpu_custom_call.1} parent=39 // pred_region
          %222 = dma.done %s214, 1024
        $region44: #{tpu_custom_call.1} parent=39 // pred_fallthru
          _
        %s223 = sand.u32 %s30, 1
        %s224 = scalar_lea.sflag [#allocation3], %s223
        %s225 = sand.u32 %s30, 1
        %s226 = smul.addr %s225, 64
        %s227 = scalar_lea.vmem [#allocation2], %s226
        %p228 = pneg %p43
        %p229 = pneg %p40
        %p230 = pneg %p64
        %p231 = pneg %p61
        %p232 = pneg %p85
        %p233 = pneg %p82
        %p234 = pneg %p106
        %p235 = pneg %p103
        %p236 = pneg %p127
        %p237 = pneg %p124
        %p238 = pneg %p153
        %p239 = pneg %p150
        %s240 = sand.u32 %s140, 1
        %s241 = scalar_lea.sflag [#allocation4], %s240
        %s242 = sand.u32 %s140, 1
        %s243 = smul.addr %s242, 64
        %s244 = scalar_lea.vmem [#allocation5], %s243
        %v245 = vld [vmem:[%s217] sm:$0xff]
        %v246 = vld [vmem:[%s217 + $0x8] sm:$0xff]
        %v247 = vld [vmem:[%s217 + $0x10] sm:$0xff]
        %v248 = vld [vmem:[%s217 + $0x18] sm:$0xff]
        %v249 = vld [vmem:[%s217 + $0x20] sm:$0xff]
        %v250 = vld [vmem:[%s217 + $0x28] sm:$0xff]
        %v251 = vld [vmem:[%s217 + $0x30] sm:$0xff]
        %v252 = vld [vmem:[%s217 + $0x38] sm:$0xff]
        %v253 = vadd.f32 %v245, %v246
        %254 = vadd.xlane.f32.xlu0 %v253
        %v255 = vpop.xlane.xlu0 %254
        %v256 = vadd.f32 %v247, %v248
        %257 = vadd.xlane.f32.xlu0 %v256
        %v258 = vpop.xlane.xlu0 %257
        %v259 = vadd.f32 %v249, %v250
        %260 = vadd.xlane.f32.xlu0 %v259
        %v261 = vpop.xlane.xlu0 %260
        %v262 = vadd.f32 %v251, %v252
        %263 = vadd.xlane.f32.xlu0 %v262
        %v264 = vpop.xlane.xlu0 %263
        %v265 = vrcp.pop 256.0
        %v266 = vmul.f32 256.0, %v265
        %v267 = vsub.f32 1.0, %v266
        %v268 = vmul.f32 %v265, %v267
        %v269 = vadd.f32 %v265, %v268
        %vm270 = vweird.f32 %v265
        %v271 = vsel %vm270, %v265, %v269
        %v272 = vmul.f32 %v255, %v271
        %v273 = vmul.f32 %v258, %v271
        %v274 = vmul.f32 %v261, %v271
        %v275 = vmul.f32 %v264, %v271
        %v276 = vld [vmem:[%s1] sm:$0xff]
        %v277 = vld [vmem:[%s1 + $0x8] sm:$0xff]
        %v278 = vld [vmem:[%s1 + $0x10] sm:$0xff]
        %v279 = vld [vmem:[%s1 + $0x18] sm:$0xff]
        %v280 = vmul.f32 %v276, %v272
        %v281 = vmul.f32 %v277, %v273
        %v282 = vmul.f32 %v278, %v274
        %v283 = vmul.f32 %v279, %v275
        %vm284 = vcmask 130048
        %v285 = vsel %vm284, %v280, 0.0
        %v286 = vsel %vm284, %v281, 0.0
        %v287 = vadd.f32 %v285, %v286
        %v288 = vsel %vm284, %v282, 0.0
        %v289 = vadd.f32 %v287, %v288
        %v290 = vsel %vm284, %v283, 0.0
        %v291 = vadd.f32 %v289, %v290
        %v292 = vrot.slane %v291, 4
        %v293 = vadd.f32 %v291, %v292
        %v294 = vrot.slane %v293, 2
        %v295 = vadd.f32 %v293, %v294
        %v296 = vrot.slane %v295, 1
        %v297 = vadd.f32 %v295, %v296
        %v298 = vld [vmem:[%s2] sm:$0x1]
        %v299 = vadd.f32 %v297, %v298
        %v300 = vmax.f32 %v299, 0.0
        %v301 = vld [vmem:[%s3] sm:$0xff]
        %v302 = vld [vmem:[%s3 + $0x8] sm:$0xff]
        %v303 = vld [vmem:[%s3 + $0x10] sm:$0xff]
        %v304 = vld [vmem:[%s3 + $0x18] sm:$0xff]
        %v305 = vperm.slane %v300, 0
        %v306 = vmul.f32 %v301, %v305
        %v307 = vmul.f32 %v302, %v305
        %v308 = vmul.f32 %v303, %v305
        %v309 = vmul.f32 %v304, %v305
        %v310 = vsel %vm284, %v306, 0.0
        %311 = vadd.xlane.f32.xlu0 %v310
        %v312 = vpop.xlane.xlu0 %311
        %v313 = vsel %vm284, %v307, 0.0
        %314 = vadd.xlane.f32.xlu0 %v313
        %v315 = vpop.xlane.xlu0 %314
        %v316 = vsel %vm284, %v308, 0.0
        %317 = vadd.xlane.f32.xlu0 %v316
        %v318 = vpop.xlane.xlu0 %317
        %v319 = vsel %vm284, %v309, 0.0
        %320 = vadd.xlane.f32.xlu0 %v319
        %v321 = vpop.xlane.xlu0 %320
        %v322 = vld [vmem:[%s4] sm:$0xff]
        %v323 = vld [vmem:[%s4 + $0x8] sm:$0xff]
        %v324 = vld [vmem:[%s4 + $0x10] sm:$0xff]
        %v325 = vld [vmem:[%s4 + $0x18] sm:$0xff]
        %v326 = vadd.f32 %v312, %v322
        %v327 = vadd.f32 %v315, %v323
        %v328 = vadd.f32 %v318, %v324
        %v329 = vadd.f32 %v321, %v325
        %v330 = vxor.u32 %v326, 2147483648
        %v331 = vxor.u32 %v327, 2147483648
        %v332 = vxor.u32 %v328, 2147483648
        %v333 = vxor.u32 %v329, 2147483648
        %v334 = vmul.f32 %v330, 1.442695
        %v335 = vpow.pop %v334
        %v336 = vmul.f32 %v331, 1.442695
        %v337 = vpow.pop %v336
        %v338 = vmul.f32 %v332, 1.442695
        %v339 = vpow.pop %v338
        %v340 = vmul.f32 %v333, 1.442695
        %v341 = vpow.pop %v340
        %v342 = vadd.f32 %v335, 1.0
        %v343 = vadd.f32 %v337, 1.0
        %v344 = vadd.f32 %v339, 1.0
        %v345 = vadd.f32 %v341, 1.0
        %v346 = vrcp.pop %v342
        %v347 = vmul.f32 %v342, %v346
        %v348 = vsub.f32 1.0, %v347
        %v349 = vmul.f32 %v346, %v348
        %v350 = vadd.f32 %v346, %v349
        %vm351 = vweird.f32 %v342
        %vm352 = vweird.f32 %v346
        %vm353 = vmor %vm351, %vm352
        %v354 = vsel %vm353, %v346, %v350
        %v355 = vand.u32 2147483647, %v342
        %vm356 = vcmp.eq.f32.partialorder %v355, 8.507059e+37
        %v357 = vand.u32 %v342, 2147483648
        %v358 = vor.u32 1.1754944e-38, %v357
        %v359 = vsel %vm356, %v358, %v354
        %v360 = vmul.f32 1.0, %v359
        %v361 = vrcp.pop %v343
        %v362 = vmul.f32 %v343, %v361
        %v363 = vsub.f32 1.0, %v362
        %v364 = vmul.f32 %v361, %v363
        %v365 = vadd.f32 %v361, %v364
        %vm366 = vweird.f32 %v343
        %vm367 = vweird.f32 %v361
        %vm368 = vmor %vm366, %vm367
        %v369 = vsel %vm368, %v361, %v365
        %v370 = vand.u32 2147483647, %v343
        %vm371 = vcmp.eq.f32.partialorder %v370, 8.507059e+37
        %v372 = vand.u32 %v343, 2147483648
        %v373 = vor.u32 1.1754944e-38, %v372
        %v374 = vsel %vm371, %v373, %v369
        %v375 = vmul.f32 1.0, %v374
        %v376 = vrcp.pop %v344
        %v377 = vmul.f32 %v344, %v376
        %v378 = vsub.f32 1.0, %v377
        %v379 = vmul.f32 %v376, %v378
        %v380 = vadd.f32 %v376, %v379
        %vm381 = vweird.f32 %v344
        %vm382 = vweird.f32 %v376
        %vm383 = vmor %vm381, %vm382
        %v384 = vsel %vm383, %v376, %v380
        %v385 = vand.u32 2147483647, %v344
        %vm386 = vcmp.eq.f32.partialorder %v385, 8.507059e+37
        %v387 = vand.u32 %v344, 2147483648
        %v388 = vor.u32 1.1754944e-38, %v387
        %v389 = vsel %vm386, %v388, %v384
        %v390 = vmul.f32 1.0, %v389
        %v391 = vrcp.pop %v345
        %v392 = vmul.f32 %v345, %v391
        %v393 = vsub.f32 1.0, %v392
        %v394 = vmul.f32 %v391, %v393
        %v395 = vadd.f32 %v391, %v394
        %vm396 = vweird.f32 %v345
        %vm397 = vweird.f32 %v391
        %vm398 = vmor %vm396, %vm397
        %v399 = vsel %vm398, %v391, %v395
        %v400 = vand.u32 2147483647, %v345
        %vm401 = vcmp.eq.f32.partialorder %v400, 8.507059e+37
        %v402 = vand.u32 %v345, 2147483648
        %v403 = vor.u32 1.1754944e-38, %v402
        %v404 = vsel %vm401, %v403, %v399
        %v405 = vmul.f32 1.0, %v404
        %407 = vset.pattern.permute.xlu0 0
        %408 = vperm.xlu0 %407, %v360
        %v409 = vpop.permute.xlu0 %408
        %412 = vset.pattern.permute.xlu0 0
        %413 = vperm.xlu0 %412, %v375
        %v414 = vpop.permute.xlu0 %413
        %417 = vset.pattern.permute.xlu0 0
        %418 = vperm.xlu0 %417, %v390
        %v419 = vpop.permute.xlu0 %418
        %422 = vset.pattern.permute.xlu0 0
        %423 = vperm.xlu0 %422, %v405
        %v424 = vpop.permute.xlu0 %423
        %v426 = vmul.f32 %v245, %v409
        %v427 = vmul.f32 %v246, %v409
        %v428 = vmul.f32 %v247, %v414
        %v429 = vmul.f32 %v248, %v414
        %v430 = vmul.f32 %v249, %v419
        %v431 = vmul.f32 %v250, %v419
        %v432 = vmul.f32 %v251, %v424
        %v433 = vmul.f32 %v252, %v424
        %434 = vst [vmem:[%s244] sm:$0xff] %v426
        %435 = vst [vmem:[%s244 + $0x8] sm:$0xff] %v427
        %436 = vst [vmem:[%s244 + $0x10] sm:$0xff] %v428
        %437 = vst [vmem:[%s244 + $0x18] sm:$0xff] %v429
        %438 = vst [vmem:[%s244 + $0x20] sm:$0xff] %v430
        %439 = vst [vmem:[%s244 + $0x28] sm:$0xff] %v431
        %440 = vst [vmem:[%s244 + $0x30] sm:$0xff] %v432
        %441 = vst [vmem:[%s244 + $0x38] sm:$0xff] %v433
        %s442 = sand.u32 %s140, 1
        %s443 = scalar_lea.sflag [#allocation4], %s442
        %s444 = sand.u32 %s140, 1
        %s445 = smul.addr %s444, 64
        %s446 = scalar_lea.vmem [#allocation5], %s445
        // Predicated region
        $region45: #{tpu_custom_call.1} parent=39 // pred_check
          %p447 = pneg %p150
        $region46: #{tpu_custom_call.1} parent=39 // pred_check_branch
          %449 = sbr.rel (%p447) target = $region48
        $region47: #{tpu_custom_call.1} parent=39 // pred_region
          %451 = vsyncadd %s443, 0
          %s452 = smul.addr %s22, 8
          %s453 = smul.addr %s452, 8
          %s454 = scalar_lea.hbm %s5, %s453
          %s455 = sshll.u32 %s446, 4
          %s456 = int_to_ptr.vmem [resolvable:$true] %s455
          %s457 = sshll.u32 %s454, 4
          %s458 = int_to_ptr.hbm [resolvable:$true] %s457
          %463 = dma.vmem_to_hbm [thread:$0]  %s456, 1024, %s458, %s443, 256, 256, 16
        $region48: #{tpu_custom_call.1} parent=39 // pred_fallthru
          _
      $region40: #{tpu_custom_call.1} parent=5 // pred_fallthru
        _
      %p464 = scmp.le.s32.totalorder 2, %s17
      // Predicated region
      $region49: #{tpu_custom_call.1} parent=5 // pred_check
        %p465 = pneg %p464
      $region50: #{tpu_custom_call.1} parent=5 // pred_check_branch
        %467 = sbr.rel (%p465) target = $region52
      $region51: #{tpu_custom_call.1} parent=5 // pred_region
        %s468 = ssub.s32 %s17, 2
        // Predicated region
        $region53: #{tpu_custom_call.1} parent=51 // pred_check
          %p469 = pneg %p156
        $region54: #{tpu_custom_call.1} parent=51 // pred_check_branch
          %471 = sbr.rel (%p469) target = $region56
        $region55: #{tpu_custom_call.1} parent=51 // pred_region
          %s472 = sand.u32 %s141, 1
          %s473 = scalar_lea.sflag [#allocation4], %s472
          %s474 = sand.u32 %s141, 1
          %s475 = smul.addr %s474, 64
          %s476 = scalar_lea.vmem [#allocation5], %s475
          %478 = dma.done %s473, 1024
        $region56: #{tpu_custom_call.1} parent=51 // pred_fallthru
          _
      $region52: #{tpu_custom_call.1} parent=5 // pred_fallthru
        _
    $region6: #{tpu_custom_call.1} parent=1 // loop_footer
      %s21 = sadd.s32 1, %s17
    $region7: #{tpu_custom_call.1} parent=1 // loop_footer_branch
      %16 = sbr.rel target = $region3
    $region8: #{tpu_custom_call.1} parent=1 // loop_exit
      _
    %479 = vsyncpa [#allocation3], 1
    %s480 = scalar_lea.sflag [#allocation3], 1
    %481 = vsyncpa %s480, 1
    %482 = vsyncpa [#allocation4], 1
    %s483 = scalar_lea.sflag [#allocation4], 1
    %484 = vsyncpa %s483, 1

</llo_original>
